<compile_context>
chip_gen: v7x
topology: tpu7x:2x2x1
jax: 0.10.0
libtpu: 0.0.40
codegen_flags: <defaults>
</compile_context>

<pallas_src>
import functools

import jax
import jax.numpy as jnp
from jax.experimental import pallas as pl
from jax.experimental.pallas import tpu as pltpu

_LANE = 128
_SUBLANE = 8
_BLOCK_BUDGET = 16 * 1024 * 1024   # double-buffered streamed block bytes per grid step
_VMEM_LIMIT = 48 * 1024 * 1024     # explicit scoped-VMEM limit (fits v5e/v6e/v7x)


def _round_up(x, m):
    return (x + m - 1) // m * m


# --------------- fused single pass: a full-HW row slab is VMEM resident --------------

def _dmaf_fused_kernel(x1_ref, x2_ref, o_ref, *, inv_hw):
    # x1/x2/o: (rows, HW).  Per-row reduce -> tanh -> broadcast multiply, one store.
    d = x1_ref[...].astype(jnp.float32) - x2_ref[...].astype(jnp.float32)
    neg_w = -jnp.tanh(jnp.sum(d, axis=1, keepdims=True) * inv_hw)    # = weight_ir
    # x1_weight = (x1-x2)*w_ir and x2_weight = (x2-x1)*w_vis are bit-identical.
    o_ref[...] = (d * neg_w).astype(o_ref.dtype)


# --------------- two-pass fallback: HW too large for a resident row slab -------------

def _dmaf_weight_kernel(x1_ref, x2_ref, w_ref, *, inv_hw, hw, hw_tile):
    # x1/x2: (rows, hw_tile); w: (rows, 1) f32, resident across the HW (arbitrary) axis.
    j = pl.program_id(1)

    @pl.when(j == 0)
    def _():
        w_ref[...] = jnp.zeros_like(w_ref)

    d = x1_ref[...].astype(jnp.float32) - x2_ref[...].astype(jnp.float32)
    # Mask lanes of the ragged last HW tile (loads past the array end are undefined).
    lane = jax.lax.broadcasted_iota(jnp.int32, d.shape, 1) + j * hw_tile
    d = jnp.where(lane < hw, d, 0.0)
    w_ref[...] += jnp.sum(d, axis=1, keepdims=True)

    @pl.when(j == pl.num_programs(1) - 1)
    def _():
        # Store -tanh(mean(x1-x2)) = weight_ir so the apply pass is one multiply.
        w_ref[...] = -jnp.tanh(w_ref[...] * inv_hw)


def _dmaf_apply_kernel(w_ref, x1_ref, x2_ref, o_ref):
    d = x1_ref[...].astype(jnp.float32) - x2_ref[...].astype(jnp.float32)
    o_ref[...] = (d * w_ref[...]).astype(o_ref.dtype)


def dmaf_forward(x, *, block_budget_bytes=_BLOCK_BUDGET, vmem_limit_bytes=_VMEM_LIMIT):
    """x: tuple/list (x1, x2) of (N, C, H, W) arrays. Returns (x1_weight, x2_weight)."""
    x1, x2 = x[0], x[1]
    assert x1.shape == x2.shape and x1.dtype == x2.dtype
    N, C, H, W = x1.shape
    HW = H * W
    NC = N * C
    dtype = x1.dtype
    dtsize = jnp.dtype(dtype).itemsize
    inv_hw = 1.0 / HW

    # Free reshape: rows (N*C) on the sublane axis, HW on the lane axis.
    x1f = x1.reshape(NC, HW)
    x2f = x2.reshape(NC, HW)

    def compiler(sem):
        return pltpu.CompilerParams(dimension_semantics=sem,
                                    vmem_limit_bytes=vmem_limit_bytes)

    # Rows per block such that 3 streamed arrays (x1, x2, out), double buffered,
    # stay inside the block budget when the whole HW extent is resident.
    fused_rows = (block_budget_bytes // (2 * 3 * HW * dtsize)) // _SUBLANE * _SUBLANE

    if fused_rows >= _SUBLANE:
        # ---------------- fused single pass, grid over row blocks only --------------
        # Aim for >=4 row blocks when possible (feeds both v7x TensorCores and
        # overlaps the pipeline prologue/epilogue) without exceeding the VMEM bound.
        rows = min(fused_rows, max(_SUBLANE, _round_up(pl.cdiv(NC, 4), _SUBLANE)))
        if rows >= NC:
            rows = NC                      # single block == full dim (always legal)
        grid = (pl.cdiv(NC, rows),)
        spec = pl.BlockSpec((rows, HW), lambda i: (i, 0))

        out = pl.pallas_call(
            functools.partial(_dmaf_fused_kernel, inv_hw=inv_hw),
            out_shape=jax.ShapeDtypeStruct((NC, HW), dtype),
            grid_spec=pltpu.PrefetchScalarGridSpec(
                num_scalar_prefetch=0, grid=grid,
                in_specs=[spec, spec], out_specs=spec),
            compiler_params=compiler(("parallel",)),
            cost_estimate=pl.CostEstimate(
                flops=3 * NC * HW, transcendentals=NC,
                bytes_accessed=3 * NC * HW * dtsize),
        )(x1f, x2f)
    else:
        # ---------------- two-pass streaming fallback (very large HW) ---------------
        rows = _SUBLANE if NC >= _SUBLANE else NC
        hw_tile = (block_budget_bytes // (2 * 3 * rows * dtsize)) // _LANE * _LANE
        hw_tile = max(_LANE, min(hw_tile, _round_up(HW, _LANE)))
        grid = (pl.cdiv(NC, rows), pl.cdiv(HW, hw_tile))

        tile_spec = pl.BlockSpec((rows, hw_tile), lambda i, j: (i, j))
        w_spec = pl.BlockSpec((rows, 1), lambda i, j: (i, 0))

        # Pass 1: per-row weight = -tanh(mean_HW(x1 - x2)), accumulated in the
        # resident f32 output block (reduction axis last, "arbitrary").
        weight = pl.pallas_call(
            functools.partial(_dmaf_weight_kernel, inv_hw=inv_hw, hw=HW,
                              hw_tile=hw_tile),
            out_shape=jax.ShapeDtypeStruct((NC, 1), jnp.float32),
            grid_spec=pltpu.PrefetchScalarGridSpec(
                num_scalar_prefetch=0, grid=grid,
                in_specs=[tile_spec, tile_spec], out_specs=w_spec),
            compiler_params=compiler(("parallel", "arbitrary")),
            cost_estimate=pl.CostEstimate(
                flops=2 * NC * HW, transcendentals=NC,
                bytes_accessed=2 * NC * HW * dtsize + NC * 4),
        )(x1f, x2f)

        # Pass 2: stream lane-dense tiles, single broadcast multiply, single output.
        out = pl.pallas_call(
            _dmaf_apply_kernel,
            out_shape=jax.ShapeDtypeStruct((NC, HW), dtype),
            grid_spec=pltpu.PrefetchScalarGridSpec(
                num_scalar_prefetch=0, grid=grid,
                in_specs=[w_spec, tile_spec, tile_spec], out_specs=tile_spec),
            compiler_params=compiler(("parallel", "parallel")),
            cost_estimate=pl.CostEstimate(
                flops=2 * NC * HW, transcendentals=0,
                bytes_accessed=3 * NC * HW * dtsize + NC * 4),
        )(weight, x1f, x2f)

    y = out.reshape(N, C, H, W)
    # x2_weight == x1_weight exactly (tanh is odd); return the same immutable array.
    return y, y


if __name__ == "__main__":
    key = jax.random.PRNGKey(0)
    k1, k2 = jax.random.split(key)
    N, C, H, W = 2, 4, 16, 16
    x1 = jax.random.normal(k1, (N, C, H, W), dtype=jnp.float32)
    x2 = jax.random.normal(k2, (N, C, H, W), dtype=jnp.float32)

    y1, y2 = dmaf_forward((x1, x2))
    y1 = jax.block_until_ready(y1)
    y2 = jax.block_until_ready(y2)

    # Reference: literal transcription of the PyTorch forward in plain JAX.
    sub_vis = x1 - x2
    w_vis = jnp.tanh(jnp.mean(sub_vis, axis=(2, 3), keepdims=True))
    sub_ir = x2 - x1
    w_ir = jnp.tanh(jnp.mean(sub_ir, axis=(2, 3), keepdims=True))
    ref1 = sub_vis * w_ir
    ref2 = sub_ir * w_vis

    assert jnp.allclose(y1, ref1, atol=1e-5, rtol=1e-5), "x1_weight mismatch vs reference"
    assert jnp.allclose(y2, ref2, atol=1e-5, rtol=1e-5), "x2_weight mismatch vs reference"

    print("KERNEL_OK")
</pallas_src>

<mosaic_0001>
module attributes {stable_mosaic.version = 11 : i64} {
  func.func @_dmaf_fused_kernel(%arg0: i32, %arg1: memref<8x256xf32, #tpu.memory_space<vmem>>, %arg2: memref<8x256xf32, #tpu.memory_space<vmem>>, %arg3: memref<8x256xf32, #tpu.memory_space<vmem>>) attributes {dimension_semantics = [#tpu.dimension_semantics<parallel>], iteration_bounds = array<i64: 1>, scalar_prefetch = 0 : i64, scratch_operands = 0 : i64, tpu.core_type = #tpu.core_type<tc>, window_params = [{transform_indices = @transform_0, window_bounds = array<i64: 8, 256>}, {transform_indices = @transform_1, window_bounds = array<i64: 8, 256>}, {transform_indices = @transform_2, window_bounds = array<i64: 8, 256>}]} {
    %c0 = arith.constant 0 : index
    %c0_0 = arith.constant 0 : index
    %0 = vector.load %arg1[%c0, %c0_0] : memref<8x256xf32, #tpu.memory_space<vmem>>, vector<8x256xf32>
    %c0_1 = arith.constant 0 : index
    %c0_2 = arith.constant 0 : index
    %1 = vector.load %arg2[%c0_1, %c0_2] : memref<8x256xf32, #tpu.memory_space<vmem>>, vector<8x256xf32>
    %2 = arith.subf %0, %1 : vector<8x256xf32>
    %cst = arith.constant dense<0.000000e+00> : vector<8xf32>
    %3 = vector.multi_reduction <add>, %2, %cst [1] : vector<8x256xf32> to vector<8xf32>
    %4 = vector.shape_cast %3 : vector<8xf32> to vector<8x1xf32>
    %cst_3 = arith.constant 3.906250e-03 : f32
    %5 = vector.broadcast %cst_3 : f32 to vector<8x1xf32>
    %6 = arith.mulf %4, %5 : vector<8x1xf32>
    %7 = math.tanh %6 : vector<8x1xf32>
    %cst_4 = arith.constant 0.000000e+00 : f32
    %8 = vector.broadcast %cst_4 : f32 to vector<8x1xf32>
    %9 = arith.subf %8, %7 : vector<8x1xf32>
    %10 = vector.broadcast %9 : vector<8x1xf32> to vector<8x256xf32>
    %11 = arith.mulf %2, %10 : vector<8x256xf32>
    %c0_5 = arith.constant 0 : index
    %c0_6 = arith.constant 0 : index
    %12 = vector.load %arg3[%c0_5, %c0_6] : memref<8x256xf32, #tpu.memory_space<vmem>>, vector<8x256xf32>
    tpu.vector_store %arg3[%c0_5, %c0_6], %11 {strides = array<i32>} : memref<8x256xf32, #tpu.memory_space<vmem>>, vector<8x256xf32>,
    return
  }
  func.func @transform_0(%arg0: i32) -> (i32, i32) {
    %c0_i32 = arith.constant 0 : i32
    %c0_i32_0 = arith.constant 0 : i32
    return %arg0, %c0_i32 : i32, i32
  }
  func.func @transform_1(%arg0: i32) -> (i32, i32) {
    %c0_i32 = arith.constant 0 : i32
    %c0_i32_0 = arith.constant 0 : i32
    return %arg0, %c0_i32 : i32, i32
  }
  func.func @transform_2(%arg0: i32) -> (i32, i32) {
    %c0_i32 = arith.constant 0 : i32
    %c0_i32_0 = arith.constant 0 : i32
    return %arg0, %c0_i32 : i32, i32
  }
}

</mosaic_0001>

<llo_original>
// kernel: tpu_custom_call.1
$region0: #{tpu_custom_call.1}
  #allocation0 [shape = 'u32[]', space=smem, size = 0x4, offset = 0x4, fixed_abs, tag = 'smem constant byte address 0x4 - core index']
  #allocation1 [shape = 'u32[144,128]{1,0:T(1,128)}', space=vmem, size = 0x12000, scoped, tag = 'internal scratch']
  %s0 = inlined_call_operand.hbm [shape: f32[8,256], index: 0, kind: input, shape index: {}]
  %s1 = inlined_call_operand.hbm [shape: f32[8,256], index: 1, kind: input, shape index: {}]
  %s2 = inlined_call_operand.hbm [shape: f32[8,256], index: 2, kind: output, shape index: {}]
  %s3 = sld [smem:[#allocation0]]
  $region26: #{tpu_custom_call.1} parent=0
    _
  %s5 = ssub.s32 1, %s3
  %s6 = scalar_select 0, %s5, %s3
  $region1: #{tpu_custom_call.1} parent=0
    #allocation2 [shape = 'u8[8192]{0}', space=vmem, size = 0x2000, scoped, tag = 'input window, operand 0, single buffered']
    #allocation3 [shape = 's32[1]{0}', space=sflag, size = 0x4, scoped, tag = 'scoped memory for tpu_custom_call.1']
    #allocation4 [shape = 's32[1]{0}', space=sflag, size = 0x4, scoped, tag = 'scoped memory for tpu_custom_call.1']
    #allocation5 [shape = 'u8[8192]{0}', space=vmem, size = 0x2000, scoped, tag = 'input window, operand 1, single buffered']
    #allocation6 [shape = 's32[1]{0}', space=sflag, size = 0x4, scoped, tag = 'scoped memory for tpu_custom_call.1']
    #allocation7 [shape = 'u8[8192]{0}', space=vmem, size = 0x2000, scoped, tag = 'output window, operand 0, single buffered']
    %7 = vsyncpa [#allocation3], 0
    %8 = vsyncpa [#allocation6], 0
    %9 = vsyncpa [#allocation4], 0
    // Predicated region
    $region2: #{tpu_custom_call.1} parent=1 // pred_check
      _
    $region3: #{tpu_custom_call.1} parent=1 // pred_check_branch
      %11 = sbr.rel (0) target = $region5
    $region4: #{tpu_custom_call.1} parent=1 // pred_region
      %s13 = ssub.s32 256, 256
      %14 = vsyncadd [#allocation3], %s13
      %s16 = sshll.u32 [#allocation2], 4
      %s17 = int_to_ptr.vmem [resolvable:$true] %s16
      %19 = dma.hbm_to_vmem [thread:$0]  %s0, 256, %s17, [#allocation3]
    $region5: #{tpu_custom_call.1} parent=1 // pred_fallthru
      _
    // Predicated region
    $region6: #{tpu_custom_call.1} parent=1 // pred_check
      _
    $region7: #{tpu_custom_call.1} parent=1 // pred_check_branch
      %21 = sbr.rel (0) target = $region9
    $region8: #{tpu_custom_call.1} parent=1 // pred_region
      %s23 = ssub.s32 256, 256
      %24 = vsyncadd [#allocation6], %s23
      %s26 = sshll.u32 [#allocation5], 4
      %s27 = int_to_ptr.vmem [resolvable:$true] %s26
      %29 = dma.hbm_to_vmem [thread:$0]  %s1, 256, %s27, [#allocation6]
    $region9: #{tpu_custom_call.1} parent=1 // pred_fallthru
      _
    // Predicated region
    $region10: #{tpu_custom_call.1} parent=1 // pred_check
      _
    $region11: #{tpu_custom_call.1} parent=1 // pred_check_branch
      %31 = sbr.rel (0) target = $region13
    $region12: #{tpu_custom_call.1} parent=1 // pred_region
      %32 = dma.done [#allocation3], 256
    $region13: #{tpu_custom_call.1} parent=1 // pred_fallthru
      _
    // Predicated region
    $region14: #{tpu_custom_call.1} parent=1 // pred_check
      _
    $region15: #{tpu_custom_call.1} parent=1 // pred_check_branch
      %34 = sbr.rel (0) target = $region17
    $region16: #{tpu_custom_call.1} parent=1 // pred_region
      %35 = dma.done [#allocation6], 256
    $region17: #{tpu_custom_call.1} parent=1 // pred_fallthru
      _
    %v36 = vld [vmem:[#allocation2] sm:$0xff]
    %v37 = vld [vmem:[#allocation2 + $0x8] sm:$0xff]
    %v38 = vld [vmem:[#allocation5] sm:$0xff]
    %v39 = vld [vmem:[#allocation5 + $0x8] sm:$0xff]
    %v40 = vsub.f32 %v36, %v38
    %v41 = vsub.f32 %v37, %v39
    %v42 = vadd.f32 %v40, %v41
    %43 = vadd.xlane.f32.xlu0 %v42
    %v44 = vpop.xlane.xlu0 %43
    %v45 = vmul.f32 %v44, 0.00390625
    %v46 = vtanh.pop %v45
    %v47 = vsub.f32 0.0, %v46
    %v48 = vmul.f32 %v40, %v47
    %v49 = vmul.f32 %v41, %v47
    %50 = vst [vmem:[#allocation7] sm:$0xff] %v48
    %51 = vst [vmem:[#allocation7 + $0x8] sm:$0xff] %v49
    // Predicated region
    $region18: #{tpu_custom_call.1} parent=1 // pred_check
      _
    $region19: #{tpu_custom_call.1} parent=1 // pred_check_branch
      %53 = sbr.rel (0) target = $region21
    $region20: #{tpu_custom_call.1} parent=1 // pred_region
      %s55 = ssub.s32 256, 256
      %56 = vsyncadd [#allocation4], %s55
      %s58 = sshll.u32 [#allocation7], 4
      %s59 = int_to_ptr.vmem [resolvable:$true] %s58
      %61 = dma.vmem_to_hbm [thread:$0]  %s59, 256, %s2, [#allocation4]
    $region21: #{tpu_custom_call.1} parent=1 // pred_fallthru
      _
    // Predicated region
    $region22: #{tpu_custom_call.1} parent=1 // pred_check
      _
    $region23: #{tpu_custom_call.1} parent=1 // pred_check_branch
      %63 = sbr.rel (0) target = $region25
    $region24: #{tpu_custom_call.1} parent=1 // pred_region
      %64 = dma.done [#allocation4], 256
    $region25: #{tpu_custom_call.1} parent=1 // pred_fallthru
      _
    %65 = vsyncpa [#allocation3], 1
    %66 = vsyncpa [#allocation6], 1
    %67 = vsyncpa [#allocation4], 1

</llo_original>
